<compile_context>
chip_gen: v6e
topology: v6e:2x2x1
jax: 0.10.0
libtpu: 0.0.40
codegen_flags: <defaults>
</compile_context>

<pallas_src>
import functools

import jax
import jax.numpy as jnp
from jax.experimental import pallas as pl
from jax.experimental.pallas import tpu as pltpu


def _round_up(x, m):
    return ((x + m - 1) // m) * m


def _focal_body(logits_ref, targets_ref, alpha_ref, out_ref, *, gamma, n_valid,
                block_rows):
    i = pl.program_id(0)

    # init accumulator on the first grid step
    @pl.when(i == 0)
    def _():
        out_ref[0, 0] = jnp.float32(0.0)

    x = logits_ref[...].astype(jnp.float32)          # [TN, Cp]  (upcast in-kernel)
    t = targets_ref[...]                             # [TN, 1] int32
    tn, cp = x.shape

    class_ids = jax.lax.broadcasted_iota(jnp.int32, (tn, cp), 1)
    onehot = class_ids == t                          # [TN, Cp] (broadcast compare)

    # numerically-stable log-sum-exp over classes (padded lanes hold -1e30 -> exp == 0)
    m = jnp.max(x, axis=-1, keepdims=True)                                   # [TN, 1]
    lse = m + jnp.log(jnp.sum(jnp.exp(x - m), axis=-1, keepdims=True))       # [TN, 1]
    x_t = jnp.sum(jnp.where(onehot, x, 0.0), axis=-1, keepdims=True)         # [TN, 1]

    ce = lse - x_t                                   # per-sample cross entropy >= 0
    pt = jnp.exp(-ce)
    omp = jnp.maximum(1.0 - pt, 0.0)                 # guard tiny negative rounding

    g = float(gamma)
    if g.is_integer():
        w = omp ** int(g)                            # lax.integer_pow -> VPU multiplies
    else:
        tiny = jnp.float32(jnp.finfo(jnp.float32).tiny)
        w = jnp.where(omp > 0.0,
                      jnp.exp(jnp.float32(g) * jnp.log(jnp.maximum(omp, tiny))),
                      0.0)

    focal = w * ce                                   # [TN, 1]

    if alpha_ref is not None:
        a = alpha_ref[...].astype(jnp.float32)       # [1, Cp] (resident across grid)
        alpha_t = jnp.sum(jnp.where(onehot, a, 0.0), axis=-1, keepdims=True)
        focal = alpha_t * focal

    # mask rows that only exist because N was padded up to the tile size
    row_ids = i * block_rows + jax.lax.broadcasted_iota(jnp.int32, (tn, 1), 0)
    focal = jnp.where(row_ids < n_valid, focal, 0.0)

    out_ref[0, 0] += jnp.sum(focal)

    # finish the mean on the last grid step
    @pl.when(i == pl.num_programs(0) - 1)
    def _():
        out_ref[0, 0] = out_ref[0, 0] / jnp.float32(n_valid)


def _make_kernel(gamma, n_valid, block_rows, has_alpha):
    if has_alpha:
        def kernel(logits_ref, targets_ref, alpha_ref, out_ref):
            _focal_body(logits_ref, targets_ref, alpha_ref, out_ref,
                        gamma=gamma, n_valid=n_valid, block_rows=block_rows)
    else:
        def kernel(logits_ref, targets_ref, out_ref):
            _focal_body(logits_ref, targets_ref, None, out_ref,
                        gamma=gamma, n_valid=n_valid, block_rows=block_rows)
    return kernel


def focal_loss(logits, targets, alpha=None, gamma=2):
    """Pallas implementation of FocalLoss.forward (returns a scalar)."""
    n, c = logits.shape

    # --- pad class dim to a lane-dense multiple of 128 -----------------------
    c_pad = _round_up(c, 128)
    if c_pad != c:
        # very negative pad -> exact no-op for max / logsumexp; never selected by one-hot
        logits = jnp.pad(logits, ((0, 0), (0, c_pad - c)), constant_values=-1e30)

    # --- pick a row tile from the *native* dtype footprint --------------------
    # target ~2 MiB per logits buffer: 2 inputs x 2 double-buffers stays well
    # under v5e's 16 MiB scoped-VMEM default (and far under v7x's 64 MiB).
    itemsize = jnp.dtype(logits.dtype).itemsize
    bytes_per_row = c_pad * itemsize
    tn = (2 * 1024 * 1024) // bytes_per_row
    tn = max(8, min(512, (tn // 8) * 8))
    tn = min(tn, _round_up(n, 8))

    # --- pad batch dim to a multiple of the tile (padded rows masked in-kernel)
    n_pad = _round_up(n, tn)
    if n_pad != n:
        logits = jnp.pad(logits, ((0, n_pad - n), (0, 0)))
    t2 = targets.astype(jnp.int32).reshape(n, 1)
    if n_pad != n:
        t2 = jnp.pad(t2, ((0, n_pad - n), (0, 0)))

    grid = (n_pad // tn,)

    in_specs = [
        pl.BlockSpec((tn, c_pad), lambda i: (i, 0)),   # logits tile (pipelined)
        pl.BlockSpec((tn, 1), lambda i: (i, 0)),       # targets tile
    ]
    args = [logits, t2]

    if alpha is not None:
        a2 = alpha.astype(jnp.float32).reshape(1, c)
        if c_pad != c:
            a2 = jnp.pad(a2, ((0, 0), (0, c_pad - c)))          # pad alpha with 0
        in_specs.append(pl.BlockSpec((1, c_pad), lambda i: (0, 0)))  # resident
        args.append(a2)

    kernel = _make_kernel(gamma=gamma, n_valid=n, block_rows=tn,
                          has_alpha=alpha is not None)

    out = pl.pallas_call(
        kernel,
        out_shape=jax.ShapeDtypeStruct((1, 1), jnp.float32),
        grid=grid,
        in_specs=in_specs,
        # scalar accumulator lives in SMEM, resident across the whole grid
        out_specs=pl.BlockSpec(memory_space=pltpu.MemorySpace.SMEM),
        compiler_params=pltpu.CompilerParams(
            # reduction axis: output accumulates across grid steps
            dimension_semantics=("arbitrary",),
        ),
    )(*args)

    return out[0, 0]


def _focal_loss_ref(logits, targets, alpha=None, gamma=2):
    """Pure-JAX reference (mirrors the PyTorch forward), computed in f32."""
    x = logits.astype(jnp.float32)
    lse = jax.scipy.special.logsumexp(x, axis=-1)
    x_t = jnp.take_along_axis(x, targets[:, None], axis=-1)[:, 0]
    ce = lse - x_t
    pt = jnp.exp(-ce)
    focal = (1.0 - pt) ** gamma * ce
    if alpha is not None:
        focal = alpha.astype(jnp.float32)[targets] * focal
    return jnp.mean(focal)


if __name__ == "__main__":
    key = jax.random.PRNGKey(0)
    k_logits, k_tgt, k_alpha, k_logits2, k_tgt2 = jax.random.split(key, 5)

    gamma = 2

    # Case 1/2: N=16, C=32 (C gets lane-padded to 128 inside the wrapper)
    N, C = 16, 32
    logits = jax.random.normal(k_logits, (N, C), dtype=jnp.float32)
    targets = jax.random.randint(k_tgt, (N,), 0, C, dtype=jnp.int32)
    alpha = jax.random.uniform(k_alpha, (C,), dtype=jnp.float32,
                               minval=0.25, maxval=1.0)

    out_noalpha = jax.block_until_ready(focal_loss(logits, targets, alpha=None, gamma=gamma))
    ref_noalpha = _focal_loss_ref(logits, targets, alpha=None, gamma=gamma)
    assert jnp.allclose(out_noalpha, ref_noalpha, rtol=1e-5, atol=1e-6), (
        out_noalpha, ref_noalpha)

    out_alpha = jax.block_until_ready(focal_loss(logits, targets, alpha=alpha, gamma=gamma))
    ref_alpha = _focal_loss_ref(logits, targets, alpha=alpha, gamma=gamma)
    assert jnp.allclose(out_alpha, ref_alpha, rtol=1e-5, atol=1e-6), (out_alpha, ref_alpha)

    # Case 3: ragged batch (N=13) + bf16 logits (native-dtype HBM path), no alpha
    N2, C2 = 13, 20
    logits_bf16 = jax.random.normal(k_logits2, (N2, C2), dtype=jnp.float32).astype(jnp.bfloat16)
    targets2 = jax.random.randint(k_tgt2, (N2,), 0, C2, dtype=jnp.int32)

    out_bf16 = jax.block_until_ready(focal_loss(logits_bf16, targets2, alpha=None, gamma=gamma))
    ref_bf16 = _focal_loss_ref(logits_bf16, targets2, alpha=None, gamma=gamma)
    assert jnp.allclose(out_bf16, ref_bf16, rtol=1e-5, atol=1e-6), (out_bf16, ref_bf16)

    print("KERNEL_OK")
</pallas_src>

<mosaic_0001>
module attributes {stable_mosaic.version = 11 : i64} {
  func.func @kernel(%arg0: i32, %arg1: memref<16x128xf32, #tpu.memory_space<vmem>>, %arg2: memref<16x1xi32, #tpu.memory_space<vmem>>, %arg3: memref<1x1xf32, #tpu.memory_space<smem>>) attributes {dimension_semantics = [#tpu.dimension_semantics<arbitrary>], iteration_bounds = array<i64: 1>, scalar_prefetch = 0 : i64, scratch_operands = 0 : i64, tpu.core_type = #tpu.core_type<tc>, window_params = [{transform_indices = @transform_0, window_bounds = array<i64: 16, 128>}, {transform_indices = @transform_1, window_bounds = array<i64: 16, 1>}, {transform_indices = @transform_2, window_bounds = array<i64: 1, 1>}]} {
    %c0_i32 = arith.constant 0 : i32
    %0 = arith.cmpi eq, %arg0, %c0_i32 : i32
    %1 = arith.extui %0 : i1 to i32
    %c0_i32_0 = arith.constant 0 : i32
    %2 = arith.cmpi ne, %1, %c0_i32_0 : i32
    scf.if %2 {
      %cst_19 = arith.constant 0.000000e+00 : f32
      %c0_20 = arith.constant 0 : index
      %c0_21 = arith.constant 0 : index
      %49 = memref.load %arg3[%c0_20, %c0_21] : memref<1x1xf32, #tpu.memory_space<smem>>
      memref.store %cst_19, %arg3[%c0_20, %c0_21] : memref<1x1xf32, #tpu.memory_space<smem>>
    } else {
    }
    %c0 = arith.constant 0 : index
    %c0_1 = arith.constant 0 : index
    %3 = vector.load %arg1[%c0, %c0_1] : memref<16x128xf32, #tpu.memory_space<vmem>>, vector<16x128xf32>
    %c0_2 = arith.constant 0 : index
    %c0_3 = arith.constant 0 : index
    %4 = vector.load %arg2[%c0_2, %c0_3] : memref<16x1xi32, #tpu.memory_space<vmem>>, vector<16x1xi32>
    %5 = tpu.iota {dimensions = array<i32: 1>} : vector<16x128xi32>
    %6 = vector.broadcast %4 : vector<16x1xi32> to vector<16x128xi32>
    %7 = arith.cmpi eq, %5, %6 : vector<16x128xi32>
    %cst = arith.constant dense<0xFF800000> : vector<16xf32>
    %8 = vector.multi_reduction <maximumf>, %3, %cst [1] : vector<16x128xf32> to vector<16xf32>
    %9 = vector.shape_cast %8 : vector<16xf32> to vector<16x1xf32>
    %10 = vector.broadcast %9 : vector<16x1xf32> to vector<16x128xf32>
    %11 = arith.subf %3, %10 : vector<16x128xf32>
    %12 = math.exp %11 : vector<16x128xf32>
    %cst_4 = arith.constant dense<0.000000e+00> : vector<16xf32>
    %13 = vector.multi_reduction <add>, %12, %cst_4 [1] : vector<16x128xf32> to vector<16xf32>
    %14 = vector.shape_cast %13 : vector<16xf32> to vector<16x1xf32>
    %15 = math.log %14 : vector<16x1xf32>
    %16 = arith.addf %9, %15 : vector<16x1xf32>
    %cst_5 = arith.constant 0.000000e+00 : f32
    %17 = vector.broadcast %cst_5 : f32 to vector<16x128xf32>
    %18 = arith.select %7, %3, %17 : vector<16x128xi1>, vector<16x128xf32>
    %cst_6 = arith.constant dense<0.000000e+00> : vector<16xf32>
    %19 = vector.multi_reduction <add>, %18, %cst_6 [1] : vector<16x128xf32> to vector<16xf32>
    %20 = vector.shape_cast %19 : vector<16xf32> to vector<16x1xf32>
    %21 = arith.subf %16, %20 : vector<16x1xf32>
    %cst_7 = arith.constant 0.000000e+00 : f32
    %22 = vector.broadcast %cst_7 : f32 to vector<16x1xf32>
    %23 = arith.subf %22, %21 : vector<16x1xf32>
    %24 = math.exp %23 : vector<16x1xf32>
    %cst_8 = arith.constant 1.000000e+00 : f32
    %25 = vector.broadcast %cst_8 : f32 to vector<16x1xf32>
    %26 = arith.subf %25, %24 : vector<16x1xf32>
    %cst_9 = arith.constant 0.000000e+00 : f32
    %27 = vector.broadcast %cst_9 : f32 to vector<16x1xf32>
    %28 = arith.maximumf %26, %27 : vector<16x1xf32>
    %29 = arith.mulf %28, %28 : vector<16x1xf32>
    %30 = arith.mulf %29, %21 : vector<16x1xf32>
    %c16_i32 = arith.constant 16 : i32
    %31 = arith.muli %arg0, %c16_i32 : i32
    %32 = tpu.iota {dimensions = array<i32: 0>} : vector<16x1xi32>
    %33 = vector.broadcast %31 : i32 to vector<16x1xi32>
    %34 = arith.addi %33, %32 : vector<16x1xi32>
    %c16_i32_10 = arith.constant 16 : i32
    %35 = vector.broadcast %c16_i32_10 : i32 to vector<16x1xi32>
    %36 = arith.cmpi slt, %34, %35 : vector<16x1xi32>
    %cst_11 = arith.constant 0.000000e+00 : f32
    %37 = vector.broadcast %cst_11 : f32 to vector<16x1xf32>
    %38 = arith.select %36, %30, %37 : vector<16x1xi1>, vector<16x1xf32>
    %c0_12 = arith.constant 0 : index
    %c0_13 = arith.constant 0 : index
    %39 = memref.load %arg3[%c0_12, %c0_13] : memref<1x1xf32, #tpu.memory_space<smem>>
    %40 = vector.shape_cast %38 : vector<16x1xf32> to vector<1x16x1xf32>
    %cst_14 = arith.constant dense<0.000000e+00> : vector<1xf32>
    %41 = vector.multi_reduction <add>, %40, %cst_14 [1, 2] : vector<1x16x1xf32> to vector<1xf32>
    %42 = vector.shape_cast %41 : vector<1xf32> to vector<1x1x1xf32>
    %43 = vector.extract %42[0, 0, 0] : f32 from vector<1x1x1xf32>
    %44 = arith.addf %39, %43 : f32
    %c0_15 = arith.constant 0 : index
    %c0_16 = arith.constant 0 : index
    %45 = memref.load %arg3[%c0_15, %c0_16] : memref<1x1xf32, #tpu.memory_space<smem>>
    memref.store %44, %arg3[%c0_15, %c0_16] : memref<1x1xf32, #tpu.memory_space<smem>>
    %c0_i32_17 = arith.constant 0 : i32
    %46 = arith.cmpi eq, %arg0, %c0_i32_17 : i32
    %47 = arith.extui %46 : i1 to i32
    %c0_i32_18 = arith.constant 0 : i32
    %48 = arith.cmpi ne, %47, %c0_i32_18 : i32
    scf.if %48 {
      %c0_19 = arith.constant 0 : index
      %c0_20 = arith.constant 0 : index
      %49 = memref.load %arg3[%c0_19, %c0_20] : memref<1x1xf32, #tpu.memory_space<smem>>
      %cst_21 = arith.constant 1.600000e+01 : f32
      %50 = arith.divf %49, %cst_21 : f32
      %c0_22 = arith.constant 0 : index
      %c0_23 = arith.constant 0 : index
      %51 = memref.load %arg3[%c0_22, %c0_23] : memref<1x1xf32, #tpu.memory_space<smem>>
      memref.store %50, %arg3[%c0_22, %c0_23] : memref<1x1xf32, #tpu.memory_space<smem>>
    } else {
    }
    return
  }
  func.func @transform_0(%arg0: i32) -> (i32, i32) {
    %c0_i32 = arith.constant 0 : i32
    %c0_i32_0 = arith.constant 0 : i32
    return %arg0, %c0_i32 : i32, i32
  }
  func.func @transform_1(%arg0: i32) -> (i32, i32) {
    %c0_i32 = arith.constant 0 : i32
    %c0_i32_0 = arith.constant 0 : i32
    return %arg0, %c0_i32 : i32, i32
  }
  func.func @transform_2(%arg0: i32) -> (i32, i32) {
    %c0_i32 = arith.constant 0 : i32
    %c0_i32_0 = arith.constant 0 : i32
    %c0_i32_1 = arith.constant 0 : i32
    return %c0_i32, %c0_i32_0 : i32, i32
  }
}

</mosaic_0001>

<llo_original>
// kernel: tpu_custom_call.1
$region0: #{tpu_custom_call.1}
  #allocation0 [shape = 'u32[]', space=smem, size = 0x4, offset = 0x4, fixed_abs, tag = 'smem constant byte address 0x4 - core index']
  #allocation1 [shape = 'u32[144,128]{1,0:T(1,128)}', space=vmem, size = 0x12000, scoped, tag = 'internal scratch']
  %s0 = inlined_call_operand.vmem [shape: f32[16,128], index: 0, kind: input, shape index: {}]
  %s1 = inlined_call_operand.vmem [shape: s32[16,1], index: 1, kind: input, shape index: {}]
  %s2 = inlined_call_operand.hbm [shape: f32[1,1], index: 2, kind: output, shape index: {}]
  %s3 = sld [smem:[#allocation0]]
  $region26: #{tpu_custom_call.1} parent=0
    _
  %s5 = ssub.s32 1, %s3
  %s6 = scalar_select 0, %s5, %s3
  $region1: #{tpu_custom_call.1} parent=0
    #allocation2 [shape = 'u8[512]{0}', space=smem, size = 0x200, scoped, tag = 'output window, operand 0, single buffered']
    #allocation3 [shape = 's32[1]{0}', space=sflag, size = 0x4, scoped, tag = 'scoped memory for tpu_custom_call.1']
    %7 = vsyncpa [#allocation3], 0
    // Predicated region
    $region2: #{tpu_custom_call.1} parent=1 // pred_check
      _
    $region3: #{tpu_custom_call.1} parent=1 // pred_check_branch
      %9 = sbr.rel (0) target = $region5
    $region4: #{tpu_custom_call.1} parent=1 // pred_region
      _
    $region5: #{tpu_custom_call.1} parent=1 // pred_fallthru
      _
    // Predicated region
    $region6: #{tpu_custom_call.1} parent=1 // pred_check
      _
    $region7: #{tpu_custom_call.1} parent=1 // pred_check_branch
      %11 = sbr.rel (0) target = $region9
    $region8: #{tpu_custom_call.1} parent=1 // pred_region
      _
    $region9: #{tpu_custom_call.1} parent=1 // pred_fallthru
      _
    %p12 = scmp.eq.s32.totalorder 0, 0
    // Predicated region
    $region10: #{tpu_custom_call.1} parent=1 // pred_check
      %p13 = pneg %p12
    $region11: #{tpu_custom_call.1} parent=1 // pred_check_branch
      %15 = sbr.rel (%p13) target = $region13
    $region12: #{tpu_custom_call.1} parent=1 // pred_region
      %s16 = scalar_lea.smem [#allocation2], 0
      %17 = sst [smem:[%s16]] 0.0
    $region13: #{tpu_custom_call.1} parent=1 // pred_fallthru
      _
    %v18 = vld [vmem:[%s0] sm:$0xff]
    %v19 = vld [vmem:[%s0 + $0x8] sm:$0xff]
    %v20 = vld [vmem:[%s1] sm:$0xff]
    %v21 = vld [vmem:[%s1 + $0x8] sm:$0xff]
    %v22 = vlaneseq
    %v23 = vand.u32 %v22, 127
    %24 = vset.pattern.permute.xlu0 0
    %25 = vperm.xlu0 %24, %v20
    %v26 = vpop.permute.xlu0 %25
    %27 = vset.pattern.permute.xlu0 0
    %28 = vperm.xlu0 %27, %v21
    %v29 = vpop.permute.xlu0 %28
    %vm30 = vcmp.eq.s32.totalorder %v23, %v26
    %vm31 = vcmp.eq.s32.totalorder %v23, %v29
    %32 = vmax.xlane.f32.xlu0 %v18
    %v33 = vpop.xlane.xlu0 %32
    %34 = vmax.xlane.f32.xlu0 %v19
    %v35 = vpop.xlane.xlu0 %34
    %v36 = vsub.f32 %v18, %v33
    %v37 = vsub.f32 %v19, %v35
    %v38 = vmul.f32 %v36, 1.442695
    %v39 = vpow.pop %v38
    %v40 = vmul.f32 %v37, 1.442695
    %v41 = vpow.pop %v40
    %42 = vadd.xlane.f32.xlu0 %v39
    %v43 = vpop.xlane.xlu0 %42
    %44 = vadd.xlane.f32.xlu0 %v41
    %v45 = vpop.xlane.xlu0 %44
    %v46 = vlog2.pop %v43
    %v47 = vmul.f32 %v46, 0.6931472
    %v48 = vlog2.pop %v45
    %v49 = vmul.f32 %v48, 0.6931472
    %v50 = vadd.f32 %v33, %v47
    %v51 = vadd.f32 %v35, %v49
    %v52 = vsel %vm30, %v18, 0.0
    %v53 = vsel %vm31, %v19, 0.0
    %54 = vadd.xlane.f32.xlu0 %v52
    %v55 = vpop.xlane.xlu0 %54
    %56 = vadd.xlane.f32.xlu0 %v53
    %v57 = vpop.xlane.xlu0 %56
    %v58 = vsub.f32 %v50, %v55
    %v59 = vsub.f32 %v51, %v57
    %v60 = vsub.f32 0.0, %v58
    %v61 = vsub.f32 0.0, %v59
    %v62 = vmul.f32 %v60, 1.442695
    %v63 = vpow.pop %v62
    %v64 = vmul.f32 %v61, 1.442695
    %v65 = vpow.pop %v64
    %v66 = vsub.f32 1.0, %v63
    %v67 = vsub.f32 1.0, %v65
    %v68 = vmax.f32 %v66, 0.0
    %v69 = vmax.f32 %v67, 0.0
    %v70 = vmul.f32 %v68, %v68
    %v71 = vmul.f32 %v69, %v69
    %v72 = vmul.f32 %v70, %v58
    %v73 = vmul.f32 %v71, %v59
    %s74 = smul.u32 0, 16
    %v75 = vlaneseq
    %v76 = vshrl.u32 %v75, 7
    %v77 = vadd.s32 %v76, 8
    %v78 = vstv %s74
    %v79 = vadd.s32 %v78, %v76
    %v80 = vadd.s32 %v78, %v77
    %vm81 = vcmp.lt.s32.totalorder %v79, 16
    %vm82 = vcmp.lt.s32.totalorder %v80, 16
    %v83 = vsel %vm81, %v72, 0.0
    %v84 = vsel %vm82, %v73, 0.0
    %s85 = sld [smem:[#allocation2]]
    %vm86 = vcmask 7168
    %v87 = vsel %vm86, %v83, 0.0
    %v88 = vsel %vm86, %v84, 0.0
    %v89 = vadd.f32 %v87, %v88
    %90 = vadd.xlane.f32.xlu0 %v89
    %v91 = vpop.xlane.xlu0 %90
    %v92 = vrot.slane %v91, 4
    %v93 = vadd.f32 %v91, %v92
    %v94 = vrot.slane %v93, 2
    %v95 = vadd.f32 %v93, %v94
    %v96 = vrot.slane %v95, 1
    %v97 = vadd.f32 %v95, %v96
    %s98 = vtos %v97
    %s99 = sadd.f32 %s85, %s98
    %s100 = scalar_lea.smem [#allocation2], 0
    %101 = sst [smem:[%s100]] %s99
    // Predicated region
    $region14: #{tpu_custom_call.1} parent=1 // pred_check
      %p102 = pneg %p12
    $region15: #{tpu_custom_call.1} parent=1 // pred_check_branch
      %104 = sbr.rel (%p102) target = $region17
    $region16: #{tpu_custom_call.1} parent=1 // pred_region
      %s105 = sld [smem:[#allocation2]]
      %v106 = vrcp.pop 16.0
      %s107 = vtos %v106
      %s108 = smul.f32 %s105, %s107
      %109 = sst [smem:[%s100]] %s108
    $region17: #{tpu_custom_call.1} parent=1 // pred_fallthru
      _
    // Predicated region
    $region18: #{tpu_custom_call.1} parent=1 // pred_check
      _
    $region19: #{tpu_custom_call.1} parent=1 // pred_check_branch
      %111 = sbr.rel (0) target = $region21
    $region20: #{tpu_custom_call.1} parent=1 // pred_region
      %s113 = ssub.s32 16, 16
      %114 = vsyncadd [#allocation3], %s113
      %117 = dma.smem_to_hbm [#allocation2], 16, %s2, [#allocation3]
    $region21: #{tpu_custom_call.1} parent=1 // pred_fallthru
      _
    // Predicated region
    $region22: #{tpu_custom_call.1} parent=1 // pred_check
      _
    $region23: #{tpu_custom_call.1} parent=1 // pred_check_branch
      %119 = sbr.rel (0) target = $region25
    $region24: #{tpu_custom_call.1} parent=1 // pred_region
      %120 = dma.done [#allocation3], 16
    $region25: #{tpu_custom_call.1} parent=1 // pred_fallthru
      _
    %121 = sfence
    %122 = vsyncpa [#allocation3], 1

</llo_original>
